<compile_context>
chip_gen: v7x
topology: tpu7x:2x2x1
jax: 0.10.0
libtpu: 0.0.40
codegen_flags: <defaults>
</compile_context>

<pallas_src>
import functools

import numpy as np
import jax
import jax.numpy as jnp
from jax import lax
from jax.experimental import pallas as pl
from jax.experimental.pallas import tpu as pltpu


def _round_up(a, m):
    return (a + m - 1) // m * m


# ---------------------------------------------------------------------------
# Packed-weight layout (host side, one-time).
#
# vec slab (rv, 22) f32 — per-(image, channel) column vectors, rows b-major:
#   cols [0:9)   depthwise-1 taps (BN scale folded)   rows [0, bb*cin)
#   col   9      depthwise-1 BN shift                 rows [0, bb*cin)
#   cols [10:19) depthwise-2 taps (BN scale folded)   rows [0, bb*cmid)
#   col   19     depthwise-2 BN shift                 rows [0, bb*cmid)
#   col   20     pointwise-1 BN shift                 rows [0, bb*cmid)
#   col   21     pointwise-2 BN shift                 rows [0, bb*cout)
# mat slab (rm, kc) f32 — batch-block-diagonal 1x1-conv matrices:
#   rows [0,  0+bb*cmid) cols [0, bb*cin)  : pointwise-1 (BN scale folded)
#   rows [r2, r2+bb*cout) cols [0, bb*cmid): pointwise-2 (BN scale folded)
#   rows [r3, r3+bb*cout) cols [0, bb*cin) : residual 1x1
# ---------------------------------------------------------------------------
def _mat_layout(bb, cin, cmid, cout):
    r2 = _round_up(bb * cmid, 8)
    r3 = r2 + _round_up(bb * cout, 8)
    rows = r3 + _round_up(bb * cout, 8)
    kc = bb * max(cin, cmid)
    return r2, r3, rows, kc


def pack_weights(params, images_per_step):
    """Fold BatchNorm (inference form) into the conv weights and pack every
    DoubleConv parameter into two slabs (one DMA each)."""
    bb = images_per_step
    cin = params['wdw1'].shape[2]
    cmid = params['wpw1'].shape[1]
    cout = params['wpw2'].shape[1]

    sdw1 = params['sdw1'].reshape(cin);  bdw1 = params['bdw1'].reshape(cin)
    spw1 = params['spw1'].reshape(cmid); bpw1 = params['bpw1'].reshape(cmid)
    sdw2 = params['sdw2'].reshape(cmid); bdw2 = params['bdw2'].reshape(cmid)
    spw2 = params['spw2'].reshape(cout); bpw2 = params['bpw2'].reshape(cout)

    rv = _round_up(bb * max(cin, cmid, cout), 8)

    def tap_block(wdw, scale):                 # (3,3,c) -> (rv, 9), rows b-major
        t = (wdw * scale).reshape(9, -1).T     # (c, 9), column k = dy*3 + dx
        t = jnp.tile(t, (bb, 1))
        return jnp.pad(t, ((0, rv - t.shape[0]), (0, 0)))

    def col(v):                                # (c,) -> (rv, 1), rows b-major
        v = jnp.tile(v, (bb,))
        return jnp.pad(v, (0, rv - v.shape[0])).reshape(rv, 1)

    vec = jnp.concatenate(
        [tap_block(params['wdw1'], sdw1), col(bdw1),
         tap_block(params['wdw2'], sdw2), col(bdw2),
         col(bpw1), col(bpw2)], axis=1).astype(jnp.float32)

    eye = jnp.eye(bb, dtype=jnp.float32)
    k1 = jnp.kron(eye, (params['wpw1'] * spw1[None, :]).T)   # (bb*cmid, bb*cin)
    k2 = jnp.kron(eye, (params['wpw2'] * spw2[None, :]).T)   # (bb*cout, bb*cmid)
    kres = jnp.kron(eye, params['wres'].T)                   # (bb*cout, bb*cin)

    r2, r3, rows, kc = _mat_layout(bb, cin, cmid, cout)
    mat = jnp.zeros((rows, kc), jnp.float32)
    mat = mat.at[0:bb * cmid, 0:bb * cin].set(k1)
    mat = mat.at[r2:r2 + bb * cout, 0:bb * cmid].set(k2)
    mat = mat.at[r3:r3 + bb * cout, 0:bb * cin].set(kres)
    return vec, mat


def pick_images_per_step(n):
    """Images packed per grid step.  v5e/v6e have one TensorCore (the grid is a
    serial loop) -> pack the whole batch into one step.  On multi-TC chips
    (v7x, or anything unrecognised) keep 2 "parallel" steps so both cores work."""
    try:
        kind = jax.devices()[0].device_kind.lower()
    except Exception:
        kind = ""
    single_tc = any(t in kind for t in ("v5 lite", "v5e", "v6 lite", "v6e"))
    bb = n if (single_tc or n < 2) else max(1, n // 2)
    while n % bb:                               # must divide the batch
        bb -= 1
    return bb


# ---------------------------------------------------------------------------
# In-kernel depthwise 3x3 ('SAME' zero padding) + folded-BN shift + ReLU on a
# channel-planar slab z of shape (rows, hw): rows = (image, channel), lanes =
# pixel y*w + x.  Spatial shifts go to the XLU via pltpu.roll; the zero padding
# is realized with lane-iota border masks (identical for every sublane row, so
# packed batch images never bleed into each other).
# ---------------------------------------------------------------------------
def _depthwise3x3_bn_relu(z, vec_ref, *, tap_col, w, hw):
    rows = z.shape[0]
    lane = lax.broadcasted_iota(jnp.int32, z.shape, 1)
    if (w & (w - 1)) == 0:
        col = jnp.bitwise_and(lane, w - 1)
    else:
        col = jnp.remainder(lane, w)

    acc = jnp.zeros(z.shape, jnp.float32)
    k = 0
    for ky in (-1, 0, 1):
        if ky == 0:
            zy = z
        else:
            zy = pltpu.roll(z, shift=(-ky * w) % hw, axis=1)
            zy = jnp.where(lane < hw - w, zy, 0.0) if ky == 1 else jnp.where(lane >= w, zy, 0.0)
        for kx in (-1, 0, 1):
            if kx == 0:
                zxy = zy
            else:
                zxy = pltpu.roll(zy, shift=(-kx) % hw, axis=1)
                zxy = jnp.where(col < w - 1, zxy, 0.0) if kx == 1 else jnp.where(col >= 1, zxy, 0.0)
            acc = acc + zxy * vec_ref[0:rows, tap_col + k:tap_col + k + 1]
            k += 1
    return jnp.maximum(acc + vec_ref[0:rows, tap_col + 9:tap_col + 10], 0.0)


# ---------------------------------------------------------------------------
# DoubleConv forward: NCHW in / NCHW out, one fused pallas_call.
# ---------------------------------------------------------------------------
@functools.partial(jax.jit, static_argnames=("cmid", "cout", "images_per_step"))
def double_conv_forward(x_nchw, vec_slab, mat_slab, *, cmid, cout, images_per_step):
    n, cin, h, w = x_nchw.shape
    hw = h * w
    bb = images_per_step
    assert n % bb == 0, (n, bb)

    x3 = x_nchw.reshape(n, cin, hw).astype(jnp.float32)   # free reshape, no transpose
    r2, r3, _, _ = _mat_layout(bb, cin, cmid, cout)

    def kernel(x_ref, vec_ref, mat_ref, o_ref):
        f32 = jnp.float32
        x = x_ref[...].reshape(bb * cin, hw)               # (rows, lanes) slab

        # --- SeparableConv2d #1: depthwise -> BN -> ReLU -> pointwise -> BN -> ReLU
        d1 = _depthwise3x3_bn_relu(x, vec_ref, tap_col=0, w=w, hw=hw)
        k1 = mat_ref[0:bb * cmid, 0:bb * cin]
        p1 = jnp.maximum(jnp.dot(k1, d1, preferred_element_type=f32)
                         + vec_ref[0:bb * cmid, 20:21], 0.0)

        # --- SeparableConv2d #2
        d2 = _depthwise3x3_bn_relu(p1, vec_ref, tap_col=10, w=w, hw=hw)
        k2 = mat_ref[r2:r2 + bb * cout, 0:bb * cmid]
        p2 = jnp.maximum(jnp.dot(k2, d2, preferred_element_type=f32)
                         + vec_ref[0:bb * cout, 21:22], 0.0)

        # --- residual 1x1 conv + add: single lane-dense store
        kres = mat_ref[r3:r3 + bb * cout, 0:bb * cin]
        res = jnp.dot(kres, x, preferred_element_type=f32)
        o_ref[...] = (p2 + res).reshape(bb, cout, hw)

    # Launch-bound cost hint so XLA can schedule neighbours around the call.
    flops = 2 * n * hw * (9 * cin + cin * cmid + 9 * cmid + cmid * cout + cin * cout)
    bytes_accessed = 4 * (n * cin * hw + n * cout * hw + vec_slab.size + mat_slab.size)

    # VMEM scaling guard (v7x: 64 MiB physical / 32 MiB scoped): per-step usage
    # is O(bb*C*H*W) activations + O((bb*C)^2) weights — well under 1 MiB here.
    # For much larger H*W, tile the lane (pixel) dimension as a second grid axis.
    out = pl.pallas_call(
        kernel,
        out_shape=jax.ShapeDtypeStruct((n, cout, hw), jnp.float32),
        grid=(n // bb,),
        in_specs=[pl.BlockSpec((bb, cin, hw), lambda i: (i, 0, 0)),
                  pl.BlockSpec(vec_slab.shape, lambda i: (0, 0)),
                  pl.BlockSpec(mat_slab.shape, lambda i: (0, 0))],
        out_specs=pl.BlockSpec((bb, cout, hw), lambda i: (i, 0, 0)),
        compiler_params=pltpu.CompilerParams(dimension_semantics=("parallel",)),
        cost_estimate=pl.CostEstimate(flops=flops, transcendentals=0,
                                      bytes_accessed=bytes_accessed),
    )(x3, vec_slab, mat_slab)
    return out.reshape(n, cout, h, w)


# ---------------------------------------------------------------------------
# Deterministic parameter init (BatchNorm folded to inference scale/shift).
# ---------------------------------------------------------------------------
def init_params(key, in_channels, out_channels, mid_channels=None):
    mid = mid_channels or out_channels
    eps = 1e-5
    keys = iter(jax.random.split(key, 32))

    def conv_w(shape, fan_in):
        return jax.random.normal(next(keys), shape, jnp.float32) / np.sqrt(fan_in)

    def bn(c):
        gamma = 1.0 + 0.1 * jax.random.normal(next(keys), (c,), jnp.float32)
        beta = 0.1 * jax.random.normal(next(keys), (c,), jnp.float32)
        mean = 0.1 * jax.random.normal(next(keys), (c,), jnp.float32)
        var = jax.random.uniform(next(keys), (c,), jnp.float32, minval=0.5, maxval=1.5)
        scale = gamma / jnp.sqrt(var + eps)
        shift = beta - mean * scale
        return scale, shift

    p = {}
    p['wdw1'] = conv_w((3, 3, in_channels), 9.0)
    s, b = bn(in_channels)
    p['sdw1'], p['bdw1'] = s.reshape(1, 1, -1), b.reshape(1, 1, -1)
    p['wpw1'] = conv_w((in_channels, mid), in_channels)
    s, b = bn(mid)
    p['spw1'], p['bpw1'] = s.reshape(1, -1), b.reshape(1, -1)
    p['wdw2'] = conv_w((3, 3, mid), 9.0)
    s, b = bn(mid)
    p['sdw2'], p['bdw2'] = s.reshape(1, 1, -1), b.reshape(1, 1, -1)
    p['wpw2'] = conv_w((mid, out_channels), mid)
    s, b = bn(out_channels)
    p['spw2'], p['bpw2'] = s.reshape(1, -1), b.reshape(1, -1)
    p['wres'] = conv_w((in_channels, out_channels), in_channels)
    return p


# ---------------------------------------------------------------------------
# Pure-JAX reference (correctness check only).
# ---------------------------------------------------------------------------
def ref_forward(x_nchw, params):
    x = jnp.transpose(x_nchw, (0, 2, 3, 1)).astype(jnp.float32)

    def sep(z, wdw, sdw, bdw, wpw, spw, bpw):
        c = z.shape[-1]
        dw = lax.conv_general_dilated(
            z, wdw.reshape(3, 3, 1, c), (1, 1), 'SAME',
            dimension_numbers=('NHWC', 'HWIO', 'NHWC'), feature_group_count=c)
        dw = jnp.maximum(dw * sdw.reshape(1, 1, 1, c) + bdw.reshape(1, 1, 1, c), 0.0)
        pw = jnp.einsum('nhwc,cd->nhwd', dw, wpw)
        d = pw.shape[-1]
        return jnp.maximum(pw * spw.reshape(1, 1, 1, d) + bpw.reshape(1, 1, 1, d), 0.0)

    y = sep(x, params['wdw1'], params['sdw1'], params['bdw1'],
            params['wpw1'], params['spw1'], params['bpw1'])
    y = sep(y, params['wdw2'], params['sdw2'], params['bdw2'],
            params['wpw2'], params['spw2'], params['bpw2'])
    res = jnp.einsum('nhwc,cd->nhwd', x, params['wres'])
    return jnp.transpose(res + y, (0, 3, 1, 2))


if __name__ == "__main__":
    key = jax.random.PRNGKey(0)
    kx, kp = jax.random.split(key)

    N, Cin, H, W = 2, 8, 16, 16
    Cout = 8
    Cmid = Cout                       # DoubleConv default: mid_channels = out_channels

    x = jax.random.normal(kx, (N, Cin, H, W), jnp.float32)    # NCHW, like PyTorch
    params = init_params(kp, Cin, Cout, Cmid)

    bb = pick_images_per_step(N)                              # 1 (v7x) or 2 (v5e/v6e)
    vec_slab, mat_slab = pack_weights(params, bb)             # one-time host packing

    out = double_conv_forward(x, vec_slab, mat_slab,
                              cmid=Cmid, cout=Cout, images_per_step=bb)
    out = jax.block_until_ready(out)
    ref = jax.block_until_ready(ref_forward(x, params))

    assert out.shape == (N, Cout, H, W), out.shape
    np.testing.assert_allclose(np.asarray(out), np.asarray(ref), rtol=2e-3, atol=2e-3)
    print("KERNEL_OK")
</pallas_src>

<mosaic_0001>
module attributes {stable_mosaic.version = 11 : i64} {
  func.func @kernel(%arg0: i32, %arg1: memref<1x8x256xf32, #tpu.memory_space<vmem>>, %arg2: memref<8x22xf32, #tpu.memory_space<vmem>>, %arg3: memref<24x8xf32, #tpu.memory_space<vmem>>, %arg4: memref<1x8x256xf32, #tpu.memory_space<vmem>>) attributes {dimension_semantics = [#tpu.dimension_semantics<parallel>], iteration_bounds = array<i64: 2>, scalar_prefetch = 0 : i64, scratch_operands = 0 : i64, tpu.core_type = #tpu.core_type<tc>, window_params = [{transform_indices = @transform_0, window_bounds = array<i64: 1, 8, 256>}, {pipeline_mode = #tpu.pipeline_mode<synchronous>, transform_indices = @transform_1, window_bounds = array<i64: 8, 22>}, {pipeline_mode = #tpu.pipeline_mode<synchronous>, transform_indices = @transform_2, window_bounds = array<i64: 24, 8>}, {transform_indices = @transform_3, window_bounds = array<i64: 1, 8, 256>}]} {
    %c0 = arith.constant 0 : index
    %c0_0 = arith.constant 0 : index
    %c0_1 = arith.constant 0 : index
    %0 = vector.load %arg1[%c0, %c0_0, %c0_1] : memref<1x8x256xf32, #tpu.memory_space<vmem>>, vector<1x8x256xf32>
    %1 = vector.shape_cast %0 : vector<1x8x256xf32> to vector<8x256xf32>
    %2 = tpu.iota {dimensions = array<i32: 1>} : vector<8x256xi32>
    %c15_i32 = arith.constant 15 : i32
    %3 = vector.broadcast %c15_i32 : i32 to vector<8x256xi32>
    %4 = arith.andi %2, %3 : vector<8x256xi32>
    %cst = arith.constant 0.000000e+00 : f32
    %5 = vector.broadcast %cst : f32 to vector<8x256xf32>
    %c16_i32 = arith.constant 16 : i32
    %6 = tpu.dynamic_rotate %1 by %c16_i32 dim 1 : vector<8x256xf32>, i32 -> vector<8x256xf32>
    %c16_i32_2 = arith.constant 16 : i32
    %7 = vector.broadcast %c16_i32_2 : i32 to vector<8x256xi32>
    %8 = arith.cmpi sge, %2, %7 : vector<8x256xi32>
    %cst_3 = arith.constant 0.000000e+00 : f32
    %9 = vector.broadcast %cst_3 : f32 to vector<8x256xf32>
    %10 = arith.select %8, %6, %9 : vector<8x256xi1>, vector<8x256xf32>
    %c1_i32 = arith.constant 1 : i32
    %11 = tpu.dynamic_rotate %10 by %c1_i32 dim 1 : vector<8x256xf32>, i32 -> vector<8x256xf32>
    %c1_i32_4 = arith.constant 1 : i32
    %12 = vector.broadcast %c1_i32_4 : i32 to vector<8x256xi32>
    %13 = arith.cmpi sge, %4, %12 : vector<8x256xi32>
    %cst_5 = arith.constant 0.000000e+00 : f32
    %14 = vector.broadcast %cst_5 : f32 to vector<8x256xf32>
    %15 = arith.select %13, %11, %14 : vector<8x256xi1>, vector<8x256xf32>
    %c0_6 = arith.constant 0 : index
    %c0_7 = arith.constant 0 : index
    %16 = vector.load %arg2[%c0_6, %c0_7] : memref<8x22xf32, #tpu.memory_space<vmem>>, vector<8x1xf32>
    %17 = vector.broadcast %16 : vector<8x1xf32> to vector<8x256xf32>
    %18 = arith.mulf %15, %17 : vector<8x256xf32>
    %19 = arith.addf %5, %18 : vector<8x256xf32>
    %c0_8 = arith.constant 0 : index
    %c1 = arith.constant 1 : index
    %20 = vector.load %arg2[%c0_8, %c1] : memref<8x22xf32, #tpu.memory_space<vmem>>, vector<8x1xf32>
    %21 = vector.broadcast %20 : vector<8x1xf32> to vector<8x256xf32>
    %22 = arith.mulf %10, %21 : vector<8x256xf32>
    %23 = arith.addf %19, %22 : vector<8x256xf32>
    %c255_i32 = arith.constant 255 : i32
    %24 = tpu.dynamic_rotate %10 by %c255_i32 dim 1 : vector<8x256xf32>, i32 -> vector<8x256xf32>
    %c15_i32_9 = arith.constant 15 : i32
    %25 = vector.broadcast %c15_i32_9 : i32 to vector<8x256xi32>
    %26 = arith.cmpi slt, %4, %25 : vector<8x256xi32>
    %cst_10 = arith.constant 0.000000e+00 : f32
    %27 = vector.broadcast %cst_10 : f32 to vector<8x256xf32>
    %28 = arith.select %26, %24, %27 : vector<8x256xi1>, vector<8x256xf32>
    %c0_11 = arith.constant 0 : index
    %c2 = arith.constant 2 : index
    %29 = vector.load %arg2[%c0_11, %c2] : memref<8x22xf32, #tpu.memory_space<vmem>>, vector<8x1xf32>
    %30 = vector.broadcast %29 : vector<8x1xf32> to vector<8x256xf32>
    %31 = arith.mulf %28, %30 : vector<8x256xf32>
    %32 = arith.addf %23, %31 : vector<8x256xf32>
    %c1_i32_12 = arith.constant 1 : i32
    %33 = tpu.dynamic_rotate %1 by %c1_i32_12 dim 1 : vector<8x256xf32>, i32 -> vector<8x256xf32>
    %c1_i32_13 = arith.constant 1 : i32
    %34 = vector.broadcast %c1_i32_13 : i32 to vector<8x256xi32>
    %35 = arith.cmpi sge, %4, %34 : vector<8x256xi32>
    %cst_14 = arith.constant 0.000000e+00 : f32
    %36 = vector.broadcast %cst_14 : f32 to vector<8x256xf32>
    %37 = arith.select %35, %33, %36 : vector<8x256xi1>, vector<8x256xf32>
    %c0_15 = arith.constant 0 : index
    %c3 = arith.constant 3 : index
    %38 = vector.load %arg2[%c0_15, %c3] : memref<8x22xf32, #tpu.memory_space<vmem>>, vector<8x1xf32>
    %39 = vector.broadcast %38 : vector<8x1xf32> to vector<8x256xf32>
    %40 = arith.mulf %37, %39 : vector<8x256xf32>
    %41 = arith.addf %32, %40 : vector<8x256xf32>
    %c0_16 = arith.constant 0 : index
    %c4 = arith.constant 4 : index
    %42 = vector.load %arg2[%c0_16, %c4] : memref<8x22xf32, #tpu.memory_space<vmem>>, vector<8x1xf32>
    %43 = vector.broadcast %42 : vector<8x1xf32> to vector<8x256xf32>
    %44 = arith.mulf %1, %43 : vector<8x256xf32>
    %45 = arith.addf %41, %44 : vector<8x256xf32>
    %c255_i32_17 = arith.constant 255 : i32
    %46 = tpu.dynamic_rotate %1 by %c255_i32_17 dim 1 : vector<8x256xf32>, i32 -> vector<8x256xf32>
    %c15_i32_18 = arith.constant 15 : i32
    %47 = vector.broadcast %c15_i32_18 : i32 to vector<8x256xi32>
    %48 = arith.cmpi slt, %4, %47 : vector<8x256xi32>
    %cst_19 = arith.constant 0.000000e+00 : f32
    %49 = vector.broadcast %cst_19 : f32 to vector<8x256xf32>
    %50 = arith.select %48, %46, %49 : vector<8x256xi1>, vector<8x256xf32>
    %c0_20 = arith.constant 0 : index
    %c5 = arith.constant 5 : index
    %51 = vector.load %arg2[%c0_20, %c5] : memref<8x22xf32, #tpu.memory_space<vmem>>, vector<8x1xf32>
    %52 = vector.broadcast %51 : vector<8x1xf32> to vector<8x256xf32>
    %53 = arith.mulf %50, %52 : vector<8x256xf32>
    %54 = arith.addf %45, %53 : vector<8x256xf32>
    %c240_i32 = arith.constant 240 : i32
    %55 = tpu.dynamic_rotate %1 by %c240_i32 dim 1 : vector<8x256xf32>, i32 -> vector<8x256xf32>
    %c240_i32_21 = arith.constant 240 : i32
    %56 = vector.broadcast %c240_i32_21 : i32 to vector<8x256xi32>
    %57 = arith.cmpi slt, %2, %56 : vector<8x256xi32>
    %cst_22 = arith.constant 0.000000e+00 : f32
    %58 = vector.broadcast %cst_22 : f32 to vector<8x256xf32>
    %59 = arith.select %57, %55, %58 : vector<8x256xi1>, vector<8x256xf32>
    %c1_i32_23 = arith.constant 1 : i32
    %60 = tpu.dynamic_rotate %59 by %c1_i32_23 dim 1 : vector<8x256xf32>, i32 -> vector<8x256xf32>
    %c1_i32_24 = arith.constant 1 : i32
    %61 = vector.broadcast %c1_i32_24 : i32 to vector<8x256xi32>
    %62 = arith.cmpi sge, %4, %61 : vector<8x256xi32>
    %cst_25 = arith.constant 0.000000e+00 : f32
    %63 = vector.broadcast %cst_25 : f32 to vector<8x256xf32>
    %64 = arith.select %62, %60, %63 : vector<8x256xi1>, vector<8x256xf32>
    %c0_26 = arith.constant 0 : index
    %c6 = arith.constant 6 : index
    %65 = vector.load %arg2[%c0_26, %c6] : memref<8x22xf32, #tpu.memory_space<vmem>>, vector<8x1xf32>
    %66 = vector.broadcast %65 : vector<8x1xf32> to vector<8x256xf32>
    %67 = arith.mulf %64, %66 : vector<8x256xf32>
    %68 = arith.addf %54, %67 : vector<8x256xf32>
    %c0_27 = arith.constant 0 : index
    %c7 = arith.constant 7 : index
    %69 = vector.load %arg2[%c0_27, %c7] : memref<8x22xf32, #tpu.memory_space<vmem>>, vector<8x1xf32>
    %70 = vector.broadcast %69 : vector<8x1xf32> to vector<8x256xf32>
    %71 = arith.mulf %59, %70 : vector<8x256xf32>
    %72 = arith.addf %68, %71 : vector<8x256xf32>
    %c255_i32_28 = arith.constant 255 : i32
    %73 = tpu.dynamic_rotate %59 by %c255_i32_28 dim 1 : vector<8x256xf32>, i32 -> vector<8x256xf32>
    %c15_i32_29 = arith.constant 15 : i32
    %74 = vector.broadcast %c15_i32_29 : i32 to vector<8x256xi32>
    %75 = arith.cmpi slt, %4, %74 : vector<8x256xi32>
    %cst_30 = arith.constant 0.000000e+00 : f32
    %76 = vector.broadcast %cst_30 : f32 to vector<8x256xf32>
    %77 = arith.select %75, %73, %76 : vector<8x256xi1>, vector<8x256xf32>
    %c0_31 = arith.constant 0 : index
    %c8 = arith.constant 8 : index
    %78 = vector.load %arg2[%c0_31, %c8] : memref<8x22xf32, #tpu.memory_space<vmem>>, vector<8x1xf32>
    %79 = vector.broadcast %78 : vector<8x1xf32> to vector<8x256xf32>
    %80 = arith.mulf %77, %79 : vector<8x256xf32>
    %81 = arith.addf %72, %80 : vector<8x256xf32>
    %c0_32 = arith.constant 0 : index
    %c9 = arith.constant 9 : index
    %82 = vector.load %arg2[%c0_32, %c9] : memref<8x22xf32, #tpu.memory_space<vmem>>, vector<8x1xf32>
    %83 = vector.broadcast %82 : vector<8x1xf32> to vector<8x256xf32>
    %84 = arith.addf %81, %83 : vector<8x256xf32>
    %cst_33 = arith.constant 0.000000e+00 : f32
    %85 = vector.broadcast %cst_33 : f32 to vector<8x256xf32>
    %86 = arith.maximumf %84, %85 : vector<8x256xf32>
    %c0_34 = arith.constant 0 : index
    %c0_35 = arith.constant 0 : index
    %87 = vector.load %arg3[%c0_34, %c0_35] : memref<24x8xf32, #tpu.memory_space<vmem>>, vector<8x8xf32>
    %cst_36 = arith.constant dense<0.000000e+00> : vector<8x256xf32>
    %88 = tpu.matmul %87, %86, %cst_36 {dimension_numbers = #tpu.dot_dimension_numbers<[1], [0], [0], [1], [0, 0, 1, 1], [], []>} : vector<8x8xf32>, vector<8x256xf32>, vector<8x256xf32> -> vector<8x256xf32>
    %c0_37 = arith.constant 0 : index
    %c20 = arith.constant 20 : index
    %89 = vector.load %arg2[%c0_37, %c20] : memref<8x22xf32, #tpu.memory_space<vmem>>, vector<8x1xf32>
    %90 = vector.broadcast %89 : vector<8x1xf32> to vector<8x256xf32>
    %91 = arith.addf %88, %90 : vector<8x256xf32>
    %cst_38 = arith.constant 0.000000e+00 : f32
    %92 = vector.broadcast %cst_38 : f32 to vector<8x256xf32>
    %93 = arith.maximumf %91, %92 : vector<8x256xf32>
    %94 = tpu.iota {dimensions = array<i32: 1>} : vector<8x256xi32>
    %c15_i32_39 = arith.constant 15 : i32
    %95 = vector.broadcast %c15_i32_39 : i32 to vector<8x256xi32>
    %96 = arith.andi %94, %95 : vector<8x256xi32>
    %cst_40 = arith.constant 0.000000e+00 : f32
    %97 = vector.broadcast %cst_40 : f32 to vector<8x256xf32>
    %c16_i32_41 = arith.constant 16 : i32
    %98 = tpu.dynamic_rotate %93 by %c16_i32_41 dim 1 : vector<8x256xf32>, i32 -> vector<8x256xf32>
    %c16_i32_42 = arith.constant 16 : i32
    %99 = vector.broadcast %c16_i32_42 : i32 to vector<8x256xi32>
    %100 = arith.cmpi sge, %94, %99 : vector<8x256xi32>
    %cst_43 = arith.constant 0.000000e+00 : f32
    %101 = vector.broadcast %cst_43 : f32 to vector<8x256xf32>
    %102 = arith.select %100, %98, %101 : vector<8x256xi1>, vector<8x256xf32>
    %c1_i32_44 = arith.constant 1 : i32
    %103 = tpu.dynamic_rotate %102 by %c1_i32_44 dim 1 : vector<8x256xf32>, i32 -> vector<8x256xf32>
    %c1_i32_45 = arith.constant 1 : i32
    %104 = vector.broadcast %c1_i32_45 : i32 to vector<8x256xi32>
    %105 = arith.cmpi sge, %96, %104 : vector<8x256xi32>
    %cst_46 = arith.constant 0.000000e+00 : f32
    %106 = vector.broadcast %cst_46 : f32 to vector<8x256xf32>
    %107 = arith.select %105, %103, %106 : vector<8x256xi1>, vector<8x256xf32>
    %c0_47 = arith.constant 0 : index
    %c10 = arith.constant 10 : index
    %108 = vector.load %arg2[%c0_47, %c10] : memref<8x22xf32, #tpu.memory_space<vmem>>, vector<8x1xf32>
    %109 = vector.broadcast %108 : vector<8x1xf32> to vector<8x256xf32>
    %110 = arith.mulf %107, %109 : vector<8x256xf32>
    %111 = arith.addf %97, %110 : vector<8x256xf32>
    %c0_48 = arith.constant 0 : index
    %c11 = arith.constant 11 : index
    %112 = vector.load %arg2[%c0_48, %c11] : memref<8x22xf32, #tpu.memory_space<vmem>>, vector<8x1xf32>
    %113 = vector.broadcast %112 : vector<8x1xf32> to vector<8x256xf32>
    %114 = arith.mulf %102, %113 : vector<8x256xf32>
    %115 = arith.addf %111, %114 : vector<8x256xf32>
    %c255_i32_49 = arith.constant 255 : i32
    %116 = tpu.dynamic_rotate %102 by %c255_i32_49 dim 1 : vector<8x256xf32>, i32 -> vector<8x256xf32>
    %c15_i32_50 = arith.constant 15 : i32
    %117 = vector.broadcast %c15_i32_50 : i32 to vector<8x256xi32>
    %118 = arith.cmpi slt, %96, %117 : vector<8x256xi32>
    %cst_51 = arith.constant 0.000000e+00 : f32
    %119 = vector.broadcast %cst_51 : f32 to vector<8x256xf32>
    %120 = arith.select %118, %116, %119 : vector<8x256xi1>, vector<8x256xf32>
    %c0_52 = arith.constant 0 : index
    %c12 = arith.constant 12 : index
    %121 = vector.load %arg2[%c0_52, %c12] : memref<8x22xf32, #tpu.memory_space<vmem>>, vector<8x1xf32>
    %122 = vector.broadcast %121 : vector<8x1xf32> to vector<8x256xf32>
    %123 = arith.mulf %120, %122 : vector<8x256xf32>
    %124 = arith.addf %115, %123 : vector<8x256xf32>
    %c1_i32_53 = arith.constant 1 : i32
    %125 = tpu.dynamic_rotate %93 by %c1_i32_53 dim 1 : vector<8x256xf32>, i32 -> vector<8x256xf32>
    %c1_i32_54 = arith.constant 1 : i32
    %126 = vector.broadcast %c1_i32_54 : i32 to vector<8x256xi32>
    %127 = arith.cmpi sge, %96, %126 : vector<8x256xi32>
    %cst_55 = arith.constant 0.000000e+00 : f32
    %128 = vector.broadcast %cst_55 : f32 to vector<8x256xf32>
    %129 = arith.select %127, %125, %128 : vector<8x256xi1>, vector<8x256xf32>
    %c0_56 = arith.constant 0 : index
    %c13 = arith.constant 13 : index
    %130 = vector.load %arg2[%c0_56, %c13] : memref<8x22xf32, #tpu.memory_space<vmem>>, vector<8x1xf32>
    %131 = vector.broadcast %130 : vector<8x1xf32> to vector<8x256xf32>
    %132 = arith.mulf %129, %131 : vector<8x256xf32>
    %133 = arith.addf %124, %132 : vector<8x256xf32>
    %c0_57 = arith.constant 0 : index
    %c14 = arith.constant 14 : index
    %134 = vector.load %arg2[%c0_57, %c14] : memref<8x22xf32, #tpu.memory_space<vmem>>, vector<8x1xf32>
    %135 = vector.broadcast %134 : vector<8x1xf32> to vector<8x256xf32>
    %136 = arith.mulf %93, %135 : vector<8x256xf32>
    %137 = arith.addf %133, %136 : vector<8x256xf32>
    %c255_i32_58 = arith.constant 255 : i32
    %138 = tpu.dynamic_rotate %93 by %c255_i32_58 dim 1 : vector<8x256xf32>, i32 -> vector<8x256xf32>
    %c15_i32_59 = arith.constant 15 : i32
    %139 = vector.broadcast %c15_i32_59 : i32 to vector<8x256xi32>
    %140 = arith.cmpi slt, %96, %139 : vector<8x256xi32>
    %cst_60 = arith.constant 0.000000e+00 : f32
    %141 = vector.broadcast %cst_60 : f32 to vector<8x256xf32>
    %142 = arith.select %140, %138, %141 : vector<8x256xi1>, vector<8x256xf32>
    %c0_61 = arith.constant 0 : index
    %c15 = arith.constant 15 : index
    %143 = vector.load %arg2[%c0_61, %c15] : memref<8x22xf32, #tpu.memory_space<vmem>>, vector<8x1xf32>
    %144 = vector.broadcast %143 : vector<8x1xf32> to vector<8x256xf32>
    %145 = arith.mulf %142, %144 : vector<8x256xf32>
    %146 = arith.addf %137, %145 : vector<8x256xf32>
    %c240_i32_62 = arith.constant 240 : i32
    %147 = tpu.dynamic_rotate %93 by %c240_i32_62 dim 1 : vector<8x256xf32>, i32 -> vector<8x256xf32>
    %c240_i32_63 = arith.constant 240 : i32
    %148 = vector.broadcast %c240_i32_63 : i32 to vector<8x256xi32>
    %149 = arith.cmpi slt, %94, %148 : vector<8x256xi32>
    %cst_64 = arith.constant 0.000000e+00 : f32
    %150 = vector.broadcast %cst_64 : f32 to vector<8x256xf32>
    %151 = arith.select %149, %147, %150 : vector<8x256xi1>, vector<8x256xf32>
    %c1_i32_65 = arith.constant 1 : i32
    %152 = tpu.dynamic_rotate %151 by %c1_i32_65 dim 1 : vector<8x256xf32>, i32 -> vector<8x256xf32>
    %c1_i32_66 = arith.constant 1 : i32
    %153 = vector.broadcast %c1_i32_66 : i32 to vector<8x256xi32>
    %154 = arith.cmpi sge, %96, %153 : vector<8x256xi32>
    %cst_67 = arith.constant 0.000000e+00 : f32
    %155 = vector.broadcast %cst_67 : f32 to vector<8x256xf32>
    %156 = arith.select %154, %152, %155 : vector<8x256xi1>, vector<8x256xf32>
    %c0_68 = arith.constant 0 : index
    %c16 = arith.constant 16 : index
    %157 = vector.load %arg2[%c0_68, %c16] : memref<8x22xf32, #tpu.memory_space<vmem>>, vector<8x1xf32>
    %158 = vector.broadcast %157 : vector<8x1xf32> to vector<8x256xf32>
    %159 = arith.mulf %156, %158 : vector<8x256xf32>
    %160 = arith.addf %146, %159 : vector<8x256xf32>
    %c0_69 = arith.constant 0 : index
    %c17 = arith.constant 17 : index
    %161 = vector.load %arg2[%c0_69, %c17] : memref<8x22xf32, #tpu.memory_space<vmem>>, vector<8x1xf32>
    %162 = vector.broadcast %161 : vector<8x1xf32> to vector<8x256xf32>
    %163 = arith.mulf %151, %162 : vector<8x256xf32>
    %164 = arith.addf %160, %163 : vector<8x256xf32>
    %c255_i32_70 = arith.constant 255 : i32
    %165 = tpu.dynamic_rotate %151 by %c255_i32_70 dim 1 : vector<8x256xf32>, i32 -> vector<8x256xf32>
    %c15_i32_71 = arith.constant 15 : i32
    %166 = vector.broadcast %c15_i32_71 : i32 to vector<8x256xi32>
    %167 = arith.cmpi slt, %96, %166 : vector<8x256xi32>
    %cst_72 = arith.constant 0.000000e+00 : f32
    %168 = vector.broadcast %cst_72 : f32 to vector<8x256xf32>
    %169 = arith.select %167, %165, %168 : vector<8x256xi1>, vector<8x256xf32>
    %c0_73 = arith.constant 0 : index
    %c18 = arith.constant 18 : index
    %170 = vector.load %arg2[%c0_73, %c18] : memref<8x22xf32, #tpu.memory_space<vmem>>, vector<8x1xf32>
    %171 = vector.broadcast %170 : vector<8x1xf32> to vector<8x256xf32>
    %172 = arith.mulf %169, %171 : vector<8x256xf32>
    %173 = arith.addf %164, %172 : vector<8x256xf32>
    %c0_74 = arith.constant 0 : index
    %c19 = arith.constant 19 : index
    %174 = vector.load %arg2[%c0_74, %c19] : memref<8x22xf32, #tpu.memory_space<vmem>>, vector<8x1xf32>
    %175 = vector.broadcast %174 : vector<8x1xf32> to vector<8x256xf32>
    %176 = arith.addf %173, %175 : vector<8x256xf32>
    %cst_75 = arith.constant 0.000000e+00 : f32
    %177 = vector.broadcast %cst_75 : f32 to vector<8x256xf32>
    %178 = arith.maximumf %176, %177 : vector<8x256xf32>
    %c8_76 = arith.constant 8 : index
    %c0_77 = arith.constant 0 : index
    %179 = vector.load %arg3[%c8_76, %c0_77] : memref<24x8xf32, #tpu.memory_space<vmem>>, vector<8x8xf32>
    %cst_78 = arith.constant dense<0.000000e+00> : vector<8x256xf32>
    %180 = tpu.matmul %179, %178, %cst_78 {dimension_numbers = #tpu.dot_dimension_numbers<[1], [0], [0], [1], [0, 0, 1, 1], [], []>} : vector<8x8xf32>, vector<8x256xf32>, vector<8x256xf32> -> vector<8x256xf32>
    %c0_79 = arith.constant 0 : index
    %c21 = arith.constant 21 : index
    %181 = vector.load %arg2[%c0_79, %c21] : memref<8x22xf32, #tpu.memory_space<vmem>>, vector<8x1xf32>
    %182 = vector.broadcast %181 : vector<8x1xf32> to vector<8x256xf32>
    %183 = arith.addf %180, %182 : vector<8x256xf32>
    %cst_80 = arith.constant 0.000000e+00 : f32
    %184 = vector.broadcast %cst_80 : f32 to vector<8x256xf32>
    %185 = arith.maximumf %183, %184 : vector<8x256xf32>
    %c16_81 = arith.constant 16 : index
    %c0_82 = arith.constant 0 : index
    %186 = vector.load %arg3[%c16_81, %c0_82] : memref<24x8xf32, #tpu.memory_space<vmem>>, vector<8x8xf32>
    %cst_83 = arith.constant dense<0.000000e+00> : vector<8x256xf32>
    %187 = tpu.matmul %186, %1, %cst_83 {dimension_numbers = #tpu.dot_dimension_numbers<[1], [0], [0], [1], [0, 0, 1, 1], [], []>} : vector<8x8xf32>, vector<8x256xf32>, vector<8x256xf32> -> vector<8x256xf32>
    %188 = arith.addf %185, %187 : vector<8x256xf32>
    %189 = vector.shape_cast %188 : vector<8x256xf32> to vector<1x8x256xf32>
    %c0_84 = arith.constant 0 : index
    %c0_85 = arith.constant 0 : index
    %c0_86 = arith.constant 0 : index
    %190 = vector.load %arg4[%c0_84, %c0_85, %c0_86] : memref<1x8x256xf32, #tpu.memory_space<vmem>>, vector<1x8x256xf32>
    tpu.vector_store %arg4[%c0_84, %c0_85, %c0_86], %189 {strides = array<i32>} : memref<1x8x256xf32, #tpu.memory_space<vmem>>, vector<1x8x256xf32>,
    return
  }
  func.func @transform_0(%arg0: i32) -> (i32, i32, i32) {
    %c0_i32 = arith.constant 0 : i32
    %c0_i32_0 = arith.constant 0 : i32
    %c0_i32_1 = arith.constant 0 : i32
    return %arg0, %c0_i32, %c0_i32_0 : i32, i32, i32
  }
  func.func @transform_1(%arg0: i32) -> (i32, i32) {
    %c0_i32 = arith.constant 0 : i32
    %c0_i32_0 = arith.constant 0 : i32
    %c0_i32_1 = arith.constant 0 : i32
    return %c0_i32, %c0_i32_0 : i32, i32
  }
  func.func @transform_2(%arg0: i32) -> (i32, i32) {
    %c0_i32 = arith.constant 0 : i32
    %c0_i32_0 = arith.constant 0 : i32
    %c0_i32_1 = arith.constant 0 : i32
    return %c0_i32, %c0_i32_0 : i32, i32
  }
  func.func @transform_3(%arg0: i32) -> (i32, i32, i32) {
    %c0_i32 = arith.constant 0 : i32
    %c0_i32_0 = arith.constant 0 : i32
    %c0_i32_1 = arith.constant 0 : i32
    return %arg0, %c0_i32, %c0_i32_0 : i32, i32, i32
  }
}

</mosaic_0001>

<llo_original>
// kernel: double_conv_forward.1
$region0: #{double_conv_forward.1}
  #allocation0 [shape = 'u32[]', space=smem, size = 0x4, offset = 0x4, fixed_abs, tag = 'smem constant byte address 0x4 - core index']
  #allocation1 [shape = 'u32[144,128]{1,0:T(1,128)}', space=vmem, size = 0x12000, scoped, tag = 'internal scratch']
  %s0 = inlined_call_operand.vmem [shape: f32[2,8,256], index: 0, kind: input, shape index: {}]
  %s1 = inlined_call_operand.vmem [shape: f32[8,22], index: 1, kind: input, shape index: {}]
  %s2 = inlined_call_operand.vmem [shape: f32[24,8], index: 2, kind: input, shape index: {}]
  %s3 = inlined_call_operand.vmem [shape: f32[2,8,256], index: 3, kind: output, shape index: {}]
  %s4 = sld [smem:[#allocation0]]
  $region45: #{double_conv_forward.1} parent=0
    _
  %s6 = ssub.s32 1, %s4
  %s7 = scalar_select 0, %s6, %s4
  loop: start=0, step=1, limit=4
  $region2: #{double_conv_forward.1} parent=0 // loop_pre_header
    _
  $region3: #{double_conv_forward.1} parent=0 // loop_header
    %s9 = sphi 0, %s13
    %p10 = scmp.ge.s32.totalorder %s9, 4
    %s19 = sphi 0, %s21
    %s22 = sphi 0, %s19
    %s23 = sphi 0, %s22
    %s39 = sphi 0, %s23
    %s43 = sphi 0, %s43
    %s45 = sphi 0, %s43
    %s46 = sphi 0, %s45
    %s60 = sphi 0, %s46
    %s64 = sphi 0, %s64
    %s66 = sphi 0, %s64
    %s67 = sphi 0, %s66
    %s81 = sphi 0, %s67
    %s87 = sphi 0, %s89
    %s90 = sphi 0, %s87
    %s91 = sphi 0, %s90
    %s107 = sphi 0, %s91
  $region4: #{double_conv_forward.1} parent=0 // loop_header_branch
    %12 = sbr.rel (%p10) target = $region8
  $region5: #{double_conv_forward.1} parent=0 // loop_body
    %s14 = ssub.s32 %s9, 1
    %s15 = ssub.s32 %s9, 2
    %s16 = sadd.s32 %s9, 1
    %s17 = ssub.s32 %s9, %s16
    %p18 = scmp.eq.s32.totalorder %s17, 0
    %s20 = sadd.s32 %s19, 1
    %s21 = scalar_select %p18, %s19, %s20
    %p24 = pneg %p18
    %p25 = scmp.eq.s32.totalorder %s9, 1
    %p26 = por %p24, %p25
    %p27 = scmp.ne.s32.totalorder %s19, %s22
    %p28 = scmp.eq.s32.totalorder %s9, 0
    %p29 = por %p27, %p28
    %p30 = scmp.ne.s32.totalorder %s19, %s22
    %p31 = scmp.eq.s32.totalorder %s14, 1
    %p32 = por %p30, %p31
    %p33 = scmp.ne.s32.totalorder %s22, %s23
    %p34 = scmp.eq.s32.totalorder %s14, 0
    %p35 = por %p33, %p34
    %p36 = scmp.ne.s32.totalorder %s22, %s23
    %p37 = scmp.eq.s32.totalorder %s15, 1
    %p38 = por %p36, %p37
    %p40 = scmp.ne.s32.totalorder %s23, %s39
    %p41 = scmp.eq.s32.totalorder %s15, 0
    %p42 = por %p40, %p41
    %s44 = sadd.s32 %s43, 1
    %p47 = scmp.eq.s32.totalorder %s9, 1
    %p48 = scmp.ne.s32.totalorder %s43, %s45
    %p49 = scmp.eq.s32.totalorder %s9, 0
    %p50 = por %p48, %p49
    %p51 = scmp.ne.s32.totalorder %s43, %s45
    %p52 = scmp.eq.s32.totalorder %s14, 1
    %p53 = por %p51, %p52
    %p54 = scmp.ne.s32.totalorder %s45, %s46
    %p55 = scmp.eq.s32.totalorder %s14, 0
    %p56 = por %p54, %p55
    %p57 = scmp.ne.s32.totalorder %s45, %s46
    %p58 = scmp.eq.s32.totalorder %s15, 1
    %p59 = por %p57, %p58
    %p61 = scmp.ne.s32.totalorder %s46, %s60
    %p62 = scmp.eq.s32.totalorder %s15, 0
    %p63 = por %p61, %p62
    %s65 = sadd.s32 %s64, 1
    %p68 = scmp.eq.s32.totalorder %s9, 1
    %p69 = scmp.ne.s32.totalorder %s64, %s66
    %p70 = scmp.eq.s32.totalorder %s9, 0
    %p71 = por %p69, %p70
    %p72 = scmp.ne.s32.totalorder %s64, %s66
    %p73 = scmp.eq.s32.totalorder %s14, 1
    %p74 = por %p72, %p73
    %p75 = scmp.ne.s32.totalorder %s66, %s67
    %p76 = scmp.eq.s32.totalorder %s14, 0
    %p77 = por %p75, %p76
    %p78 = scmp.ne.s32.totalorder %s66, %s67
    %p79 = scmp.eq.s32.totalorder %s15, 1
    %p80 = por %p78, %p79
    %p82 = scmp.ne.s32.totalorder %s67, %s81
    %p83 = scmp.eq.s32.totalorder %s15, 0
    %p84 = por %p82, %p83
    %s85 = ssub.s32 %s9, %s16
    %p86 = scmp.eq.s32.totalorder %s85, 0
    %s88 = sadd.s32 %s87, 1
    %s89 = scalar_select %p86, %s87, %s88
    %p92 = pneg %p86
    %p93 = scmp.eq.s32.totalorder %s9, 1
    %p94 = por %p92, %p93
    %p95 = scmp.ne.s32.totalorder %s87, %s90
    %p96 = scmp.eq.s32.totalorder %s9, 0
    %p97 = por %p95, %p96
    %p98 = scmp.ne.s32.totalorder %s87, %s90
    %p99 = scmp.eq.s32.totalorder %s14, 1
    %p100 = por %p98, %p99
    %p101 = scmp.ne.s32.totalorder %s90, %s91
    %p102 = scmp.eq.s32.totalorder %s14, 0
    %p103 = por %p101, %p102
    %p104 = scmp.ne.s32.totalorder %s90, %s91
    %p105 = scmp.eq.s32.totalorder %s15, 1
    %p106 = por %p104, %p105
    %p108 = scmp.ne.s32.totalorder %s91, %s107
    %p109 = scmp.eq.s32.totalorder %s15, 0
    %p110 = por %p108, %p109
    %p111 = scmp.le.s32.totalorder 1, %s9
    %p112 = scmp.lt.s32.totalorder %s9, 3
    %p113 = pnand %p111, %p112
    %p114 = pneg %p113
    // Predicated region
    $region9: #{double_conv_forward.1} parent=5 // pred_check
      _
    $region10: #{double_conv_forward.1} parent=5 // pred_check_branch
      %116 = sbr.rel (%p113) target = $region12
    $region11: #{double_conv_forward.1} parent=5 // pred_region
      %s117 = ssub.s32 %s9, 1
      // Predicated region
      $region13: #{double_conv_forward.1} parent=11 // pred_check
        %p118 = pneg %p56
      $region14: #{double_conv_forward.1} parent=11 // pred_check_branch
        %120 = sbr.rel (%p118) target = $region16
      $region15: #{double_conv_forward.1} parent=11 // pred_region
        _
      $region16: #{double_conv_forward.1} parent=11 // pred_fallthru
        _
      // Predicated region
      $region17: #{double_conv_forward.1} parent=11 // pred_check
        %p121 = pneg %p77
      $region18: #{double_conv_forward.1} parent=11 // pred_check_branch
        %123 = sbr.rel (%p121) target = $region20
      $region19: #{double_conv_forward.1} parent=11 // pred_region
        _
      $region20: #{double_conv_forward.1} parent=11 // pred_fallthru
        _
    $region12: #{double_conv_forward.1} parent=5 // pred_fallthru
      _
    %p124 = scmp.lt.s32.totalorder %s9, 2
    // Predicated region
    $region21: #{double_conv_forward.1} parent=5 // pred_check
      %p125 = pneg %p124
    $region22: #{double_conv_forward.1} parent=5 // pred_check_branch
      %127 = sbr.rel (%p125) target = $region24
    $region23: #{double_conv_forward.1} parent=5 // pred_region
      // Predicated region
      $region25: #{double_conv_forward.1} parent=23 // pred_check
        %p128 = pneg %p29
      $region26: #{double_conv_forward.1} parent=23 // pred_check_branch
        %130 = sbr.rel (%p128) target = $region28
      $region27: #{double_conv_forward.1} parent=23 // pred_region
        %p131 = scmp.lt.s32.totalorder %s9, 1
        %s132 = scalar_select %p131, %s9, 1
        %s133 = smul.addr %s132, 2
        %s134 = smul.addr %s133, 8
        %s135 = scalar_lea.vmem %s0, %s134
      $region28: #{double_conv_forward.1} parent=23 // pred_fallthru
        _
    $region24: #{double_conv_forward.1} parent=5 // pred_fallthru
      _
    %p136 = scmp.le.s32.totalorder 1, %s9
    %p137 = scmp.lt.s32.totalorder %s9, 3
    %p138 = pnand %p136, %p137
    %p139 = pneg %p138
    // Predicated region
    $region29: #{double_conv_forward.1} parent=5 // pred_check
      _
    $region30: #{double_conv_forward.1} parent=5 // pred_check_branch
      %141 = sbr.rel (%p138) target = $region32
    $region31: #{double_conv_forward.1} parent=5 // pred_region
      %s142 = ssub.s32 %s9, 1
      %p143 = scmp.lt.s32.totalorder %s14, 1
      %s144 = scalar_select %p143, %s14, 1
      %s145 = smul.addr %s144, 2
      %s146 = smul.addr %s145, 8
      %s147 = scalar_lea.vmem %s0, %s146
      %p148 = pneg %p35
      %p149 = pneg %p32
      %p150 = pneg %p56
      %p151 = pneg %p53
      %p152 = pneg %p77
      %p153 = pneg %p74
      %p154 = pneg %p103
      %p155 = pneg %p100
      %p156 = scmp.lt.s32.totalorder %s14, 1
      %s157 = scalar_select %p156, %s14, 1
      %s158 = smul.addr %s157, 2
      %s159 = smul.addr %s158, 8
      %s160 = scalar_lea.vmem %s3, %s159
      %p161 = scmp.lt.s32.totalorder %s14, 1
      %s162 = scalar_select %p161, %s14, 1
      %s163 = smul.addr %s162, 2
      %s164 = smul.addr %s163, 8
      %s165 = scalar_lea.vmem %s0, %s164
      %p166 = scmp.lt.s32.totalorder %s14, 1
      %s167 = scalar_select %p166, %s14, 1
      %s168 = smul.addr %s167, 2
      %s169 = smul.addr %s168, 8
      %s170 = scalar_lea.vmem %s3, %s169
      %v171 = vld [vmem:[%s165] sm:$0xff]
      %v172 = vld [vmem:[%s165 + $0x8] sm:$0xff]
      %v173 = vlaneseq
      %v174 = vand.u32 %v173, 127
      %v175 = vadd.s32 %v174, 128
      %v176 = vand.u32 %v174, 15
      %v177 = vand.u32 %v175, 15
      %178 = vrot.lane.b32.xlu0 %v171, 16
      %v179 = vpop.permute.xlu0 %178
      %180 = vrot.lane.b32.xlu0 %v172, 16
      %v181 = vpop.permute.xlu0 %180
      %vm182 = vcmp.lt.s32.totalorder %v174, 16
      %v183 = vsel %vm182, %v179, %v181
      %v184 = vsel %vm182, %v181, %v179
      %vm185 = vcmp.ge.s32.totalorder %v174, 16
      %vm186 = vcmp.ge.s32.totalorder %v175, 16
      %v187 = vsel %vm185, %v184, 0.0
      %v188 = vsel %vm186, %v183, 0.0
      %189 = vrot.lane.b32.xlu0 %v187, 1
      %v190 = vpop.permute.xlu0 %189
      %191 = vrot.lane.b32.xlu0 %v188, 1
      %v192 = vpop.permute.xlu0 %191
      %vm193 = vcmp.lt.s32.totalorder %v174, 1
      %v194 = vsel %vm193, %v190, %v192
      %v195 = vsel %vm193, %v192, %v190
      %vm196 = vcmp.ge.s32.totalorder %v176, 1
      %vm197 = vcmp.ge.s32.totalorder %v177, 1
      %v198 = vsel %vm196, %v195, 0.0
      %v199 = vsel %vm197, %v194, 0.0
      %v200 = vld [vmem:[%s1] sm:$0xff]
      %202 = vset.pattern.permute.xlu0 0
      %203 = vperm.xlu0 %202, %v200
      %v204 = vpop.permute.xlu0 %203
      %v206 = vmul.f32 %v198, %v204
      %v207 = vmul.f32 %v199, %v204
      %v208 = vadd.f32 %v206, 0.0
      %v209 = vadd.f32 %v207, 0.0
      %210 = vset.pattern.permute.xlu0 1
      %211 = vperm.xlu0 %210, %v200
      %v212 = vpop.permute.xlu0 %211
      %v214 = vmul.f32 %v187, %v212
      %v215 = vmul.f32 %v188, %v212
      %v216 = vadd.f32 %v208, %v214
      %v217 = vadd.f32 %v209, %v215
      %218 = vrot.lane.b32.xlu0 %v187, 127
      %v219 = vpop.permute.xlu0 %218
      %220 = vrot.lane.b32.xlu0 %v188, 127
      %v221 = vpop.permute.xlu0 %220
      %vm222 = vcmp.lt.s32.totalorder %v174, 127
      %v223 = vsel %vm222, %v219, %v221
      %v224 = vsel %vm222, %v221, %v219
      %vm225 = vcmp.lt.s32.totalorder %v176, 15
      %vm226 = vcmp.lt.s32.totalorder %v177, 15
      %v227 = vsel %vm225, %v223, 0.0
      %v228 = vsel %vm226, %v224, 0.0
      %229 = vset.pattern.permute.xlu0 2
      %230 = vperm.xlu0 %229, %v200
      %v231 = vpop.permute.xlu0 %230
      %v233 = vmul.f32 %v227, %v231
      %v234 = vmul.f32 %v228, %v231
      %v235 = vadd.f32 %v216, %v233
      %v236 = vadd.f32 %v217, %v234
      %237 = vrot.lane.b32.xlu0 %v171, 1
      %v238 = vpop.permute.xlu0 %237
      %239 = vrot.lane.b32.xlu0 %v172, 1
      %v240 = vpop.permute.xlu0 %239
      %v241 = vsel %vm193, %v238, %v240
      %v242 = vsel %vm193, %v240, %v238
      %v243 = vsel %vm196, %v242, 0.0
      %v244 = vsel %vm197, %v241, 0.0
      %245 = vset.pattern.permute.xlu0 3
      %246 = vperm.xlu0 %245, %v200
      %v247 = vpop.permute.xlu0 %246
      %v249 = vmul.f32 %v243, %v247
      %v250 = vmul.f32 %v244, %v247
      %v251 = vadd.f32 %v235, %v249
      %v252 = vadd.f32 %v236, %v250
      %253 = vset.pattern.permute.xlu0 4
      %254 = vperm.xlu0 %253, %v200
      %v255 = vpop.permute.xlu0 %254
      %v257 = vmul.f32 %v171, %v255
      %v258 = vmul.f32 %v172, %v255
      %v259 = vadd.f32 %v251, %v257
      %v260 = vadd.f32 %v252, %v258
      %261 = vrot.lane.b32.xlu0 %v171, 127
      %v262 = vpop.permute.xlu0 %261
      %263 = vrot.lane.b32.xlu0 %v172, 127
      %v264 = vpop.permute.xlu0 %263
      %v265 = vsel %vm222, %v262, %v264
      %v266 = vsel %vm222, %v264, %v262
      %v267 = vsel %vm225, %v265, 0.0
      %v268 = vsel %vm226, %v266, 0.0
      %269 = vset.pattern.permute.xlu0 5
      %270 = vperm.xlu0 %269, %v200
      %v271 = vpop.permute.xlu0 %270
      %v273 = vmul.f32 %v267, %v271
      %v274 = vmul.f32 %v268, %v271
      %v275 = vadd.f32 %v259, %v273
      %v276 = vadd.f32 %v260, %v274
      %277 = vrot.lane.b32.xlu0 %v171, 112
      %v278 = vpop.permute.xlu0 %277
      %279 = vrot.lane.b32.xlu0 %v172, 112
      %v280 = vpop.permute.xlu0 %279
      %vm281 = vcmp.lt.s32.totalorder %v174, 112
      %v282 = vsel %vm281, %v278, %v280
      %v283 = vsel %vm281, %v280, %v278
      %vm284 = vcmp.lt.s32.totalorder %v174, 240
      %vm285 = vcmp.lt.s32.totalorder %v175, 240
      %v286 = vsel %vm284, %v282, 0.0
      %v287 = vsel %vm285, %v283, 0.0
      %288 = vrot.lane.b32.xlu0 %v286, 1
      %v289 = vpop.permute.xlu0 %288
      %290 = vrot.lane.b32.xlu0 %v287, 1
      %v291 = vpop.permute.xlu0 %290
      %v292 = vsel %vm193, %v289, %v291
      %v293 = vsel %vm193, %v291, %v289
      %v294 = vsel %vm196, %v293, 0.0
      %v295 = vsel %vm197, %v292, 0.0
      %296 = vset.pattern.permute.xlu0 6
      %297 = vperm.xlu0 %296, %v200
      %v298 = vpop.permute.xlu0 %297
      %v300 = vmul.f32 %v294, %v298
      %v301 = vmul.f32 %v295, %v298
      %v302 = vadd.f32 %v275, %v300
      %v303 = vadd.f32 %v276, %v301
      %304 = vset.pattern.permute.xlu0 7
      %305 = vperm.xlu0 %304, %v200
      %v306 = vpop.permute.xlu0 %305
      %v308 = vmul.f32 %v286, %v306
      %v309 = vmul.f32 %v287, %v306
      %v310 = vadd.f32 %v302, %v308
      %v311 = vadd.f32 %v303, %v309
      %312 = vrot.lane.b32.xlu0 %v286, 127
      %v313 = vpop.permute.xlu0 %312
      %314 = vrot.lane.b32.xlu0 %v287, 127
      %v315 = vpop.permute.xlu0 %314
      %v316 = vsel %vm222, %v313, %v315
      %v317 = vsel %vm222, %v315, %v313
      %v318 = vsel %vm225, %v316, 0.0
      %v319 = vsel %vm226, %v317, 0.0
      %320 = vset.pattern.permute.xlu0 8
      %321 = vperm.xlu0 %320, %v200
      %v322 = vpop.permute.xlu0 %321
      %v324 = vmul.f32 %v318, %v322
      %v325 = vmul.f32 %v319, %v322
      %v326 = vadd.f32 %v310, %v324
      %v327 = vadd.f32 %v311, %v325
      %328 = vset.pattern.permute.xlu0 9
      %329 = vperm.xlu0 %328, %v200
      %v330 = vpop.permute.xlu0 %329
      %v332 = vadd.f32 %v326, %v330
      %v333 = vadd.f32 %v327, %v330
      %v334 = vmax.f32 %v332, 0.0
      %v335 = vmax.f32 %v333, 0.0
      %v336 = vld [vmem:[%s2] sm:$0xff]
      %337 = vset.pattern.permute.xlu0 20
      %338 = vperm.xlu0 %337, %v200
      %v339 = vpop.permute.xlu0 %338
      %vm341 = vcmask 64512
      %v343 = vsel %vm341, %v336, 0
      %345 = vmatprep.subr.mxu0 %v335
      %346 = vmatpush1.msra.mxu0 %v334
      %347 = vmatprep.subr.mxu0 0.0
      %348 = vmatpush1.msra.mxu0 0.0
      %349 = vmatprep.subr.mxu0 0.0
      %350 = vmatpush1.msra.mxu0 0.0
      %351 = vmatprep.subr.mxu0 0.0
      %352 = vmatpush1.msra.mxu0 0.0
      %353 = vmatprep.subr.mxu0 0.0
      %354 = vmatpush1.msra.mxu0 0.0
      %355 = vmatprep.subr.mxu0 0.0
      %356 = vmatpush1.msra.mxu0 0.0
      %357 = vmatprep.subr.mxu0 0.0
      %358 = vmatpush1.msra.mxu0 0.0
      %359 = vmatprep.subr.mxu0 0.0
      %360 = vmatpush1.msra.mxu0 0.0
      %361 = vmatprep.subr.mxu0 0.0
      %362 = vmatpush1.msra.mxu0 0.0
      %363 = vmatprep.subr.mxu0 0.0
      %364 = vmatpush1.msra.mxu0 0.0
      %365 = vmatprep.subr.mxu0 0.0
      %366 = vmatpush1.msra.mxu0 0.0
      %367 = vmatprep.subr.mxu0 0.0
      %368 = vmatpush1.msra.mxu0 0.0
      %369 = vmatprep.subr.mxu0 0.0
      %370 = vmatpush1.msra.mxu0 0.0
      %371 = vmatprep.subr.mxu0 0.0
      %372 = vmatpush1.msra.mxu0 0.0
      %373 = vmatprep.subr.mxu0 0.0
      %374 = vmatpush1.msra.mxu0 0.0
      %375 = vmatprep.subr.mxu0 0.0
      %376 = vmatpush1.msra.mxu0 0.0
      %377 = vmatprep.subr.mxu0 0.0
      %378 = vmatpush1.msra.mxu0 0.0
      %379 = vmatprep.subr.mxu0 0.0
      %380 = vmatpush1.msra.mxu0 0.0
      %381 = vmatprep.subr.mxu0 0.0
      %382 = vmatpush1.msra.mxu0 0.0
      %383 = vmatprep.subr.mxu0 0.0
      %384 = vmatpush1.msra.mxu0 0.0
      %385 = vmatprep.subr.mxu0 0.0
      %386 = vmatpush1.msra.mxu0 0.0
      %387 = vmatprep.subr.mxu0 0.0
      %388 = vmatpush1.msra.mxu0 0.0
      %389 = vmatprep.subr.mxu0 0.0
      %390 = vmatpush1.msra.mxu0 0.0
      %391 = vmatprep.subr.mxu0 0.0
      %392 = vmatpush1.msra.mxu0 0.0
      %393 = vmatprep.subr.mxu0 0.0
      %394 = vmatpush1.msra.mxu0 0.0
      %395 = vmatprep.subr.mxu0 0.0
      %396 = vmatpush1.msra.mxu0 0.0
      %397 = vmatprep.subr.mxu0 0.0
      %398 = vmatpush1.msra.mxu0 0.0
      %399 = vmatprep.subr.mxu0 0.0
      %400 = vmatpush1.msra.mxu0 0.0
      %401 = vmatprep.subr.mxu0 0.0
      %402 = vmatpush1.msra.mxu0 0.0
      %403 = vmatprep.subr.mxu0 0.0
      %404 = vmatpush1.msra.mxu0 0.0
      %405 = vmatprep.subr.mxu0 0.0
      %406 = vmatpush1.msra.mxu0 0.0
      %407 = vmatprep.subr.mxu0 0.0
      %408 = vmatpush1.msra.mxu0 0.0
      %409 = vmatprep.mubr.f32.mxu0 0.0
      %410 = vmatmul.mubr.f32.gmra.mrb[0].mxu0 %v343
      %v411 = vpop.f32.mrb[0].mxu0
      %v412 = vadd.f32 %v339, %v411
      %v413 = vpop.f32.mrb[0].mxu0
      %v414 = vadd.f32 %v339, %v413
      %415 = vdwg.mxu0
      %v416 = vmax.f32 %v412, 0.0
      %v417 = vmax.f32 %v414, 0.0
      %418 = vrot.lane.b32.xlu0 %v416, 16
      %v419 = vpop.permute.xlu0 %418
      %420 = vrot.lane.b32.xlu0 %v417, 16
      %v421 = vpop.permute.xlu0 %420
      %v422 = vsel %vm182, %v419, %v421
      %v423 = vsel %vm182, %v421, %v419
      %v424 = vsel %vm185, %v423, 0.0
      %v425 = vsel %vm186, %v422, 0.0
      %426 = vrot.lane.b32.xlu0 %v424, 1
      %v427 = vpop.permute.xlu0 %426
      %428 = vrot.lane.b32.xlu0 %v425, 1
      %v429 = vpop.permute.xlu0 %428
      %v430 = vsel %vm193, %v427, %v429
      %v431 = vsel %vm193, %v429, %v427
      %v432 = vsel %vm196, %v431, 0.0
      %v433 = vsel %vm197, %v430, 0.0
      %434 = vset.pattern.permute.xlu0 10
      %435 = vperm.xlu0 %434, %v200
      %v436 = vpop.permute.xlu0 %435
      %v438 = vmul.f32 %v432, %v436
      %v439 = vmul.f32 %v433, %v436
      %v440 = vadd.f32 %v438, 0.0
      %v441 = vadd.f32 %v439, 0.0
      %442 = vset.pattern.permute.xlu0 11
      %443 = vperm.xlu0 %442, %v200
      %v444 = vpop.permute.xlu0 %443
      %v446 = vmul.f32 %v424, %v444
      %v447 = vmul.f32 %v425, %v444
      %v448 = vadd.f32 %v440, %v446
      %v449 = vadd.f32 %v441, %v447
      %450 = vrot.lane.b32.xlu0 %v424, 127
      %v451 = vpop.permute.xlu0 %450
      %452 = vrot.lane.b32.xlu0 %v425, 127
      %v453 = vpop.permute.xlu0 %452
      %v454 = vsel %vm222, %v451, %v453
      %v455 = vsel %vm222, %v453, %v451
      %v456 = vsel %vm225, %v454, 0.0
      %v457 = vsel %vm226, %v455, 0.0
      %458 = vset.pattern.permute.xlu0 12
      %459 = vperm.xlu0 %458, %v200
      %v460 = vpop.permute.xlu0 %459
      %v462 = vmul.f32 %v456, %v460
      %v463 = vmul.f32 %v457, %v460
      %v464 = vadd.f32 %v448, %v462
      %v465 = vadd.f32 %v449, %v463
      %466 = vrot.lane.b32.xlu0 %v416, 1
      %v467 = vpop.permute.xlu0 %466
      %468 = vrot.lane.b32.xlu0 %v417, 1
      %v469 = vpop.permute.xlu0 %468
      %v470 = vsel %vm193, %v467, %v469
      %v471 = vsel %vm193, %v469, %v467
      %v472 = vsel %vm196, %v471, 0.0
      %v473 = vsel %vm197, %v470, 0.0
      %474 = vset.pattern.permute.xlu0 13
      %475 = vperm.xlu0 %474, %v200
      %v476 = vpop.permute.xlu0 %475
      %v478 = vmul.f32 %v472, %v476
      %v479 = vmul.f32 %v473, %v476
      %v480 = vadd.f32 %v464, %v478
      %v481 = vadd.f32 %v465, %v479
      %482 = vset.pattern.permute.xlu0 14
      %483 = vperm.xlu0 %482, %v200
      %v484 = vpop.permute.xlu0 %483
      %v486 = vmul.f32 %v416, %v484
      %v487 = vmul.f32 %v417, %v484
      %v488 = vadd.f32 %v480, %v486
      %v489 = vadd.f32 %v481, %v487
      %490 = vrot.lane.b32.xlu0 %v416, 127
      %v491 = vpop.permute.xlu0 %490
      %492 = vrot.lane.b32.xlu0 %v417, 127
      %v493 = vpop.permute.xlu0 %492
      %v494 = vsel %vm222, %v491, %v493
      %v495 = vsel %vm222, %v493, %v491
      %v496 = vsel %vm225, %v494, 0.0
      %v497 = vsel %vm226, %v495, 0.0
      %498 = vset.pattern.permute.xlu0 15
      %499 = vperm.xlu0 %498, %v200
      %v500 = vpop.permute.xlu0 %499
      %v502 = vmul.f32 %v496, %v500
      %v503 = vmul.f32 %v497, %v500
      %v504 = vadd.f32 %v488, %v502
      %v505 = vadd.f32 %v489, %v503
      %506 = vrot.lane.b32.xlu0 %v416, 112
      %v507 = vpop.permute.xlu0 %506
      %508 = vrot.lane.b32.xlu0 %v417, 112
      %v509 = vpop.permute.xlu0 %508
      %v510 = vsel %vm281, %v507, %v509
      %v511 = vsel %vm281, %v509, %v507
      %v512 = vsel %vm284, %v510, 0.0
      %v513 = vsel %vm285, %v511, 0.0
      %514 = vrot.lane.b32.xlu0 %v512, 1
      %v515 = vpop.permute.xlu0 %514
      %516 = vrot.lane.b32.xlu0 %v513, 1
      %v517 = vpop.permute.xlu0 %516
      %v518 = vsel %vm193, %v515, %v517
      %v519 = vsel %vm193, %v517, %v515
      %v520 = vsel %vm196, %v519, 0.0
      %v521 = vsel %vm197, %v518, 0.0
      %522 = vset.pattern.permute.xlu0 16
      %523 = vperm.xlu0 %522, %v200
      %v524 = vpop.permute.xlu0 %523
      %v526 = vmul.f32 %v520, %v524
      %v527 = vmul.f32 %v521, %v524
      %v528 = vadd.f32 %v504, %v526
      %v529 = vadd.f32 %v505, %v527
      %530 = vset.pattern.permute.xlu0 17
      %531 = vperm.xlu0 %530, %v200
      %v532 = vpop.permute.xlu0 %531
      %v534 = vmul.f32 %v512, %v532
      %v535 = vmul.f32 %v513, %v532
      %v536 = vadd.f32 %v528, %v534
      %v537 = vadd.f32 %v529, %v535
      %538 = vrot.lane.b32.xlu0 %v512, 127
      %v539 = vpop.permute.xlu0 %538
      %540 = vrot.lane.b32.xlu0 %v513, 127
      %v541 = vpop.permute.xlu0 %540
      %v542 = vsel %vm222, %v539, %v541
      %v543 = vsel %vm222, %v541, %v539
      %v544 = vsel %vm225, %v542, 0.0
      %v545 = vsel %vm226, %v543, 0.0
      %546 = vset.pattern.permute.xlu0 18
      %547 = vperm.xlu0 %546, %v200
      %v548 = vpop.permute.xlu0 %547
      %v550 = vmul.f32 %v544, %v548
      %v551 = vmul.f32 %v545, %v548
      %v552 = vadd.f32 %v536, %v550
      %v553 = vadd.f32 %v537, %v551
      %554 = vset.pattern.permute.xlu0 19
      %555 = vperm.xlu0 %554, %v200
      %v556 = vpop.permute.xlu0 %555
      %v558 = vadd.f32 %v552, %v556
      %v559 = vadd.f32 %v553, %v556
      %v560 = vmax.f32 %v558, 0.0
      %v561 = vmax.f32 %v559, 0.0
      %v562 = vld [vmem:[%s2 + $0x8] sm:$0xff]
      %563 = vset.pattern.permute.xlu0 21
      %564 = vperm.xlu0 %563, %v200
      %v565 = vpop.permute.xlu0 %564
      %v568 = vsel %vm341, %v562, 0
      %570 = vmatprep.subr.mxu0 %v561
      %571 = vmatpush1.msra.mxu0 %v560
      %572 = vmatprep.subr.mxu0 0.0
      %573 = vmatpush1.msra.mxu0 0.0
      %574 = vmatprep.subr.mxu0 0.0
      %575 = vmatpush1.msra.mxu0 0.0
      %576 = vmatprep.subr.mxu0 0.0
      %577 = vmatpush1.msra.mxu0 0.0
      %578 = vmatprep.subr.mxu0 0.0
      %579 = vmatpush1.msra.mxu0 0.0
      %580 = vmatprep.subr.mxu0 0.0
      %581 = vmatpush1.msra.mxu0 0.0
      %582 = vmatprep.subr.mxu0 0.0
      %583 = vmatpush1.msra.mxu0 0.0
      %584 = vmatprep.subr.mxu0 0.0
      %585 = vmatpush1.msra.mxu0 0.0
      %586 = vmatprep.subr.mxu0 0.0
      %587 = vmatpush1.msra.mxu0 0.0
      %588 = vmatprep.subr.mxu0 0.0
      %589 = vmatpush1.msra.mxu0 0.0
      %590 = vmatprep.subr.mxu0 0.0
      %591 = vmatpush1.msra.mxu0 0.0
      %592 = vmatprep.subr.mxu0 0.0
      %593 = vmatpush1.msra.mxu0 0.0
      %594 = vmatprep.subr.mxu0 0.0
      %595 = vmatpush1.msra.mxu0 0.0
      %596 = vmatprep.subr.mxu0 0.0
      %597 = vmatpush1.msra.mxu0 0.0
      %598 = vmatprep.subr.mxu0 0.0
      %599 = vmatpush1.msra.mxu0 0.0
      %600 = vmatprep.subr.mxu0 0.0
      %601 = vmatpush1.msra.mxu0 0.0
      %602 = vmatprep.subr.mxu0 0.0
      %603 = vmatpush1.msra.mxu0 0.0
      %604 = vmatprep.subr.mxu0 0.0
      %605 = vmatpush1.msra.mxu0 0.0
      %606 = vmatprep.subr.mxu0 0.0
      %607 = vmatpush1.msra.mxu0 0.0
      %608 = vmatprep.subr.mxu0 0.0
      %609 = vmatpush1.msra.mxu0 0.0
      %610 = vmatprep.subr.mxu0 0.0
      %611 = vmatpush1.msra.mxu0 0.0
      %612 = vmatprep.subr.mxu0 0.0
      %613 = vmatpush1.msra.mxu0 0.0
      %614 = vmatprep.subr.mxu0 0.0
      %615 = vmatpush1.msra.mxu0 0.0
      %616 = vmatprep.subr.mxu0 0.0
      %617 = vmatpush1.msra.mxu0 0.0
      %618 = vmatprep.subr.mxu0 0.0
      %619 = vmatpush1.msra.mxu0 0.0
      %620 = vmatprep.subr.mxu0 0.0
      %621 = vmatpush1.msra.mxu0 0.0
      %622 = vmatprep.subr.mxu0 0.0
      %623 = vmatpush1.msra.mxu0 0.0
      %624 = vmatprep.subr.mxu0 0.0
      %625 = vmatpush1.msra.mxu0 0.0
      %626 = vmatprep.subr.mxu0 0.0
      %627 = vmatpush1.msra.mxu0 0.0
      %628 = vmatprep.subr.mxu0 0.0
      %629 = vmatpush1.msra.mxu0 0.0
      %630 = vmatprep.subr.mxu0 0.0
      %631 = vmatpush1.msra.mxu0 0.0
      %632 = vmatprep.subr.mxu0 0.0
      %633 = vmatpush1.msra.mxu0 0.0
      %634 = vmatprep.mubr.f32.mxu0 0.0
      %635 = vmatmul.mubr.f32.gmra.mrb[0].mxu0 %v568
      %v636 = vpop.f32.mrb[0].mxu0
      %v637 = vadd.f32 %v565, %v636
      %v638 = vpop.f32.mrb[0].mxu0
      %v639 = vadd.f32 %v565, %v638
      %640 = vdwg.mxu0
      %v641 = vmax.f32 %v637, 0.0
      %v642 = vmax.f32 %v639, 0.0
      %v643 = vld [vmem:[%s2 + $0x10] sm:$0xff]
      %v645 = vsel %vm341, %v643, 0
      %647 = vmatprep.subr.mxu0 %v172
      %648 = vmatpush1.msra.mxu0 %v171
      %649 = vmatprep.subr.mxu0 0.0
      %650 = vmatpush1.msra.mxu0 0.0
      %651 = vmatprep.subr.mxu0 0.0
      %652 = vmatpush1.msra.mxu0 0.0
      %653 = vmatprep.subr.mxu0 0.0
      %654 = vmatpush1.msra.mxu0 0.0
      %655 = vmatprep.subr.mxu0 0.0
      %656 = vmatpush1.msra.mxu0 0.0
      %657 = vmatprep.subr.mxu0 0.0
      %658 = vmatpush1.msra.mxu0 0.0
      %659 = vmatprep.subr.mxu0 0.0
      %660 = vmatpush1.msra.mxu0 0.0
      %661 = vmatprep.subr.mxu0 0.0
      %662 = vmatpush1.msra.mxu0 0.0
      %663 = vmatprep.subr.mxu0 0.0
      %664 = vmatpush1.msra.mxu0 0.0
      %665 = vmatprep.subr.mxu0 0.0
      %666 = vmatpush1.msra.mxu0 0.0
      %667 = vmatprep.subr.mxu0 0.0
      %668 = vmatpush1.msra.mxu0 0.0
      %669 = vmatprep.subr.mxu0 0.0
      %670 = vmatpush1.msra.mxu0 0.0
      %671 = vmatprep.subr.mxu0 0.0
      %672 = vmatpush1.msra.mxu0 0.0
      %673 = vmatprep.subr.mxu0 0.0
      %674 = vmatpush1.msra.mxu0 0.0
      %675 = vmatprep.subr.mxu0 0.0
      %676 = vmatpush1.msra.mxu0 0.0
      %677 = vmatprep.subr.mxu0 0.0
      %678 = vmatpush1.msra.mxu0 0.0
      %679 = vmatprep.subr.mxu0 0.0
      %680 = vmatpush1.msra.mxu0 0.0
      %681 = vmatprep.subr.mxu0 0.0
      %682 = vmatpush1.msra.mxu0 0.0
      %683 = vmatprep.subr.mxu0 0.0
      %684 = vmatpush1.msra.mxu0 0.0
      %685 = vmatprep.subr.mxu0 0.0
      %686 = vmatpush1.msra.mxu0 0.0
      %687 = vmatprep.subr.mxu0 0.0
      %688 = vmatpush1.msra.mxu0 0.0
      %689 = vmatprep.subr.mxu0 0.0
      %690 = vmatpush1.msra.mxu0 0.0
      %691 = vmatprep.subr.mxu0 0.0
      %692 = vmatpush1.msra.mxu0 0.0
      %693 = vmatprep.subr.mxu0 0.0
      %694 = vmatpush1.msra.mxu0 0.0
      %695 = vmatprep.subr.mxu0 0.0
      %696 = vmatpush1.msra.mxu0 0.0
      %697 = vmatprep.subr.mxu0 0.0
      %698 = vmatpush1.msra.mxu0 0.0
      %699 = vmatprep.subr.mxu0 0.0
      %700 = vmatpush1.msra.mxu0 0.0
      %701 = vmatprep.subr.mxu0 0.0
      %702 = vmatpush1.msra.mxu0 0.0
      %703 = vmatprep.subr.mxu0 0.0
      %704 = vmatpush1.msra.mxu0 0.0
      %705 = vmatprep.subr.mxu0 0.0
      %706 = vmatpush1.msra.mxu0 0.0
      %707 = vmatprep.subr.mxu0 0.0
      %708 = vmatpush1.msra.mxu0 0.0
      %709 = vmatprep.subr.mxu0 0.0
      %710 = vmatpush1.msra.mxu0 0.0
      %711 = vmatprep.mubr.f32.mxu0 0.0
      %712 = vmatmul.mubr.f32.gmra.mrb[0].mxu0 %v645
      %v713 = vpop.f32.mrb[0].mxu0
      %v714 = vadd.f32 0.0, %v713
      %v715 = vpop.f32.mrb[0].mxu0
      %v716 = vadd.f32 0.0, %v715
      %717 = vdwg.mxu0
      %v718 = vadd.f32 %v641, %v714
      %v719 = vadd.f32 %v642, %v716
      %720 = vst [vmem:[%s170] sm:$0xff] %v718
      %721 = vst [vmem:[%s170 + $0x8] sm:$0xff] %v719
      %p722 = scmp.lt.s32.totalorder %s14, 1
      %s723 = scalar_select %p722, %s14, 1
      %s724 = smul.addr %s723, 2
      %s725 = smul.addr %s724, 8
      %s726 = scalar_lea.vmem %s3, %s725
      // Predicated region
      $region33: #{double_conv_forward.1} parent=31 // pred_check
        %p727 = pneg %p100
      $region34: #{double_conv_forward.1} parent=31 // pred_check_branch
        %729 = sbr.rel (%p727) target = $region36
      $region35: #{double_conv_forward.1} parent=31 // pred_region
        _
      $region36: #{double_conv_forward.1} parent=31 // pred_fallthru
        _
    $region32: #{double_conv_forward.1} parent=5 // pred_fallthru
      _
    %p730 = scmp.le.s32.totalorder 2, %s9
    // Predicated region
    $region37: #{double_conv_forward.1} parent=5 // pred_check
      %p731 = pneg %p730
    $region38: #{double_conv_forward.1} parent=5 // pred_check_branch
      %733 = sbr.rel (%p731) target = $region40
    $region39: #{double_conv_forward.1} parent=5 // pred_region
      %s734 = ssub.s32 %s9, 2
      // Predicated region
      $region41: #{double_conv_forward.1} parent=39 // pred_check
        %p735 = pneg %p106
      $region42: #{double_conv_forward.1} parent=39 // pred_check_branch
        %737 = sbr.rel (%p735) target = $region44
      $region43: #{double_conv_forward.1} parent=39 // pred_region
        %p738 = scmp.lt.s32.totalorder %s15, 1
        %s739 = scalar_select %p738, %s15, 1
        %s740 = smul.addr %s739, 2
        %s741 = smul.addr %s740, 8
        %s742 = scalar_lea.vmem %s3, %s741
      $region44: #{double_conv_forward.1} parent=39 // pred_fallthru
        _
    $region40: #{double_conv_forward.1} parent=5 // pred_fallthru
      _
  $region6: #{double_conv_forward.1} parent=0 // loop_footer
    %s13 = sadd.s32 1, %s9
  $region7: #{double_conv_forward.1} parent=0 // loop_footer_branch
    %8 = sbr.rel target = $region3
  $region8: #{double_conv_forward.1} parent=0 // loop_exit
    _

</llo_original>
